<compile_context>
chip_gen: v7x
topology: tpu7x:2x2x1
jax: 0.10.0
libtpu: 0.0.40
codegen_flags: <defaults>
</compile_context>

<pallas_src>
import functools
import math

import jax
import jax.numpy as jnp
from jax.experimental import pallas as pl
from jax.experimental.pallas import tpu as pltpu


# ----------------------------------------------------------------------------
# Kernels
# ----------------------------------------------------------------------------
def _rmsnorm_kernel(x_ref, w_ref, o_ref, *, eps, fuse_weight):
    # x_ref: (tile_rows, dim); w_ref: (1, dim).
    x = x_ref[...].astype(jnp.float32)                    # x.float()
    ms = jnp.mean(x * x, axis=-1, keepdims=True)          # x.pow(2).mean(-1, keepdim=True)
    inv = jax.lax.rsqrt(ms + eps)                         # torch.rsqrt(... + eps)  (EUP)
    if fuse_weight:
        # Optional (v5e): scale in f32 before the downcast (rounding order differs
        # from the torch reference, which downcasts then scales).
        o_ref[...] = (x * inv * w_ref[...].astype(jnp.float32)).astype(o_ref.dtype)
    else:
        # Faithful to torch ordering: downcast (.type_as(x)) then scale by weight.
        o_ref[...] = (x * inv).astype(o_ref.dtype) * w_ref[...]


def _rmsnorm_folded_kernel(x_ref, w_ref, seg_ref, segt_ref, o_ref, *, eps, dim,
                           fuse_weight):
    # Lane-dense path: each kernel row packs k = width/dim independent rows.
    # seg_ref: (width, k) 0/1 segment matrix, segt_ref: (k, width) its transpose.
    # Segmented mean + broadcast via two tiny MXU matmuls (HIGHEST precision --
    # do NOT relax to DEFAULT, bf16 rounding of x*x breaks the tolerance).
    x = x_ref[...].astype(jnp.float32)                    # (rows, width)
    seg_sum = jnp.dot(x * x, seg_ref[...],
                      preferred_element_type=jnp.float32,
                      precision=jax.lax.Precision.HIGHEST)          # (rows, k)
    inv = jax.lax.rsqrt(seg_sum * (1.0 / dim) + eps)                # (rows, k)
    inv_b = jnp.dot(inv, segt_ref[...],
                    preferred_element_type=jnp.float32,
                    precision=jax.lax.Precision.HIGHEST)            # (rows, width)
    if fuse_weight:
        o_ref[...] = (x * inv_b * w_ref[...].astype(jnp.float32)).astype(o_ref.dtype)
    else:
        o_ref[...] = (x * inv_b).astype(o_ref.dtype) * w_ref[...]


# ----------------------------------------------------------------------------
# Tiling helpers
# ----------------------------------------------------------------------------
def _vmem_budget_bytes() -> int:
    try:
        reported = int(pltpu.get_tpu_info().vmem_capacity_bytes)
    except Exception:
        reported = 64 << 20
    # Defensive per-TensorCore clamp (v7x = 64 MiB/TC even if the query reports
    # the 128 MiB per-chip number).  Costless on v5e/v6e: a ~50 MiB pipeline
    # already keeps per-step DMA far above the ~0.35 us fixed step overhead.
    return min(reported, 64 << 20)


_MIN_TILES = 8      # aim for >= 8 grid steps: both v7x TCs busy + DMA/compute overlap
_MIN_TILE_ROWS = 512  # ...but don't shrink tiles below ~512 rows just to hit 8 steps


def _pick_tile_rows(rows, width, in_bytes, out_bytes, vmem_budget, requested=None):
    """Row tile: VMEM-budget driven, sublane-pack aligned, never one giant tile
    when the rows can be split.  Grid uses pl.cdiv(rows, tile) with a ragged
    final block (OOB rows independent, dropped on writeback)."""
    pack = {4: 8, 2: 16, 1: 32}.get(in_bytes, 8)
    if rows <= pack:
        return rows                                     # full-extent block (always legal)

    # Per-row VMEM: double-buffered in/out streams + ~2 f32 compute temps
    # (temps are single-buffered, charged once).
    per_row = width * (2 * (in_bytes + out_bytes) + 8)
    cap = int(0.8 * vmem_budget) // max(per_row, 1)
    if requested is not None:
        cap = min(cap, int(requested))
    cap = max((cap // pack) * pack, pack)

    # Split target: ~_MIN_TILES steps, but keep tiles >= _MIN_TILE_ROWS when
    # that still gives >= 2 steps.
    by_split = ((rows // _MIN_TILES) // pack) * pack
    by_split = max(by_split, min(_MIN_TILE_ROWS, ((rows // 2) // pack) * pack), pack)
    tr = max(min(cap, by_split), pack)

    # Prefer an exact divisor in [tr//2, tr] (no ragged tail); otherwise keep
    # tr -- never shrink every tile just to avoid one masked tail block.
    floor = max(pack, ((tr // 2) // pack) * pack)
    t = tr
    while t >= floor:
        if rows % t == 0:
            return t
        t -= pack
    return tr


# ----------------------------------------------------------------------------
# Wrapper
# ----------------------------------------------------------------------------
def rmsnorm(x: jax.Array, weight: jax.Array, eps: float = 1e-6,
            tile_rows: int | None = None, fuse_weight_f32: bool = False) -> jax.Array:
    """RMSNorm over the last axis of x, scaled by weight (shape (dim,))."""
    orig_shape = x.shape
    dim = orig_shape[-1]
    assert weight.shape == (dim,)
    out_dtype = x.dtype

    x2d = x.reshape(-1, dim)
    rows = x2d.shape[0]

    # Lane-dense fold: if dim is not a multiple of 128 but a small k packs
    # k*dim into a multiple of 128, fold k rows per kernel row (unmasked vst
    # for the whole tensor -- the single biggest measured lever here).
    fold_k = 1
    if dim % 128 != 0:
        k = 128 // math.gcd(dim, 128)                   # = lcm(dim, 128) // dim
        if k <= 16 and dim * k <= 2048:
            fold_k = k

    w_cast = weight.astype(jnp.float32 if fuse_weight_f32 else out_dtype)

    row_pad = 0
    if fold_k > 1:
        width = fold_k * dim
        row_pad = (-rows) % fold_k
        if row_pad:
            # At most fold_k-1 padded rows; keeping lane-dense stores for the
            # whole tensor is worth this rare, tiny pad copy.
            x2d = jnp.pad(x2d, ((0, row_pad), (0, 0)))
        work = x2d.reshape((rows + row_pad) // fold_k, width)   # contiguous reshape
        w_row = jnp.tile(w_cast, fold_k).reshape(1, width)
        lane = jnp.arange(width, dtype=jnp.int32)[:, None]       # (width, 1)
        seg = jnp.arange(fold_k, dtype=jnp.int32)[None, :]       # (1, k)
        seg_mat = (lane // dim == seg).astype(jnp.float32)       # (width, k)
        seg_mat_t = jnp.transpose(seg_mat)                       # (k, width)
        kernel = functools.partial(_rmsnorm_folded_kernel, eps=eps, dim=dim,
                                   fuse_weight=fuse_weight_f32)
        extra_inputs = (seg_mat, seg_mat_t)
        extra_specs = [
            pl.BlockSpec((width, fold_k), lambda i: (0, 0)),
            pl.BlockSpec((fold_k, width), lambda i: (0, 0)),
        ]
    else:
        width = dim
        work = x2d
        w_row = w_cast.reshape(1, dim)
        kernel = functools.partial(_rmsnorm_kernel, eps=eps,
                                   fuse_weight=fuse_weight_f32)
        extra_inputs = ()
        extra_specs = []

    work_rows = work.shape[0]
    in_bytes = jnp.dtype(x.dtype).itemsize
    out_bytes = jnp.dtype(out_dtype).itemsize
    vmem_budget = _vmem_budget_bytes()

    tr = _pick_tile_rows(work_rows, width, in_bytes, out_bytes, vmem_budget,
                         requested=tile_rows)
    grid_rows = pl.cdiv(work_rows, tr)   # ragged final block, no whole-array pad

    # Scoped-VMEM: double-buffered in/out streams + f32 compute temps +
    # constants + margin, clamped under the per-TC budget.
    tile_stream = tr * width * 2 * (in_bytes + out_bytes)
    tile_temps = tr * width * 8
    fixed = width * (4 * out_bytes + 8 * fold_k + 4)
    vmem_need = tile_stream + tile_temps + fixed + (4 << 20)
    vmem_limit = int(min(0.92 * vmem_budget, max(32 << 20, vmem_need)))

    out = pl.pallas_call(
        kernel,
        out_shape=jax.ShapeDtypeStruct((work_rows, width), out_dtype),
        grid_spec=pltpu.PrefetchScalarGridSpec(
            num_scalar_prefetch=0,
            grid=(grid_rows,),
            in_specs=[
                pl.BlockSpec((tr, width), lambda i: (i, 0)),
                pl.BlockSpec((1, width), lambda i: (0, 0)),   # weight: constant block
            ] + extra_specs,
            out_specs=pl.BlockSpec((tr, width), lambda i: (i, 0)),
        ),
        compiler_params=pltpu.CompilerParams(
            dimension_semantics=("parallel",),   # v7x's 2 TCs split the row grid
            vmem_limit_bytes=vmem_limit,
        ),
    )(work, w_row, *extra_inputs)

    if fold_k > 1:
        out = out.reshape(rows + row_pad, dim)
        if row_pad:
            out = out[:rows]
    return out.reshape(orig_shape)


# ----------------------------------------------------------------------------
# Demo / self-check
# ----------------------------------------------------------------------------
if __name__ == "__main__":
    key = jax.random.PRNGKey(0)
    k1, k2, k3, k4, k5 = jax.random.split(key, 5)

    def reference(x, w, eps=1e-6):
        xf = x.astype(jnp.float32)
        normed = xf * jax.lax.rsqrt(jnp.mean(xf * xf, axis=-1, keepdims=True) + eps)
        return normed.astype(x.dtype) * w.astype(x.dtype)

    # 1) Shape implied by the module usage: (batch=2, seq=8, hidden=32).
    #    hidden < 128 exercises the lane-dense folded path (fold_k = 4).
    x_small = jax.random.normal(k1, (2, 8, 32), dtype=jnp.float32)
    w_small = jnp.ones((32,), dtype=jnp.float32)     # module init: torch.ones(dim)
    out_small = jax.block_until_ready(rmsnorm(x_small, w_small, eps=1e-6))
    assert out_small.shape == x_small.shape and out_small.dtype == x_small.dtype
    assert jnp.allclose(out_small, reference(x_small, w_small), atol=1e-5, rtol=1e-5)

    # 2) Lane-dense hidden dim (multiple of 128): generic row-tiled path with a
    #    multi-step grid and non-trivial weight.
    x_big = jax.random.normal(k2, (2, 8, 256), dtype=jnp.float32)
    w_big = 1.0 + 0.1 * jax.random.normal(k3, (256,), dtype=jnp.float32)
    out_big = jax.block_until_ready(rmsnorm(x_big, w_big, eps=1e-6))
    assert out_big.shape == x_big.shape and out_big.dtype == x_big.dtype
    assert jnp.allclose(out_big, reference(x_big, w_big), atol=1e-5, rtol=1e-5)

    # 3) dim=192 (> 128, not a multiple of 128) in bf16 with rows not divisible
    #    by fold_k: exercises the extended fold (fold_k=2, width=384) plus the
    #    tiny row-pad path.
    x_mid = jax.random.normal(k4, (3, 7, 192), dtype=jnp.bfloat16)
    w_mid = (1.0 + 0.1 * jax.random.normal(k5, (192,), dtype=jnp.float32)).astype(jnp.bfloat16)
    out_mid = jax.block_until_ready(rmsnorm(x_mid, w_mid, eps=1e-6))
    assert out_mid.shape == x_mid.shape and out_mid.dtype == x_mid.dtype
    assert jnp.allclose(out_mid.astype(jnp.float32),
                        reference(x_mid, w_mid).astype(jnp.float32),
                        atol=2e-2, rtol=2e-2)

    print("KERNEL_OK")
</pallas_src>

<mosaic_0001>
module attributes {stable_mosaic.version = 11 : i64} {
  func.func @_rmsnorm_folded_kernel(%arg0: i32, %arg1: memref<4x128xf32, #tpu.memory_space<vmem>>, %arg2: memref<1x128xf32, #tpu.memory_space<vmem>>, %arg3: memref<128x4xf32, #tpu.memory_space<vmem>>, %arg4: memref<4x128xf32, #tpu.memory_space<vmem>>, %arg5: memref<4x128xf32, #tpu.memory_space<vmem>>) attributes {dimension_semantics = [#tpu.dimension_semantics<parallel>], iteration_bounds = array<i64: 1>, scalar_prefetch = 0 : i64, scratch_operands = 0 : i64, tpu.core_type = #tpu.core_type<tc>, window_params = [{transform_indices = @transform_0, window_bounds = array<i64: 4, 128>}, {pipeline_mode = #tpu.pipeline_mode<synchronous>, transform_indices = @transform_1, window_bounds = array<i64: 1, 128>}, {pipeline_mode = #tpu.pipeline_mode<synchronous>, transform_indices = @transform_2, window_bounds = array<i64: 128, 4>}, {pipeline_mode = #tpu.pipeline_mode<synchronous>, transform_indices = @transform_3, window_bounds = array<i64: 4, 128>}, {transform_indices = @transform_4, window_bounds = array<i64: 4, 128>}]} {
    %c0 = arith.constant 0 : index
    %c0_0 = arith.constant 0 : index
    %0 = vector.load %arg1[%c0, %c0_0] : memref<4x128xf32, #tpu.memory_space<vmem>>, vector<4x128xf32>
    %1 = arith.mulf %0, %0 : vector<4x128xf32>
    %c0_1 = arith.constant 0 : index
    %c0_2 = arith.constant 0 : index
    %2 = vector.load %arg3[%c0_1, %c0_2] : memref<128x4xf32, #tpu.memory_space<vmem>>, vector<128x4xf32>
    %cst = arith.constant dense<0.000000e+00> : vector<4x4xf32>
    %3 = tpu.matmul %1, %2, %cst {dimension_numbers = #tpu.dot_dimension_numbers<[1], [0], [0], [1], [0, 0, 1, 1], [], []>, precision = #tpu.contract_precision<fp32>} : vector<4x128xf32>, vector<128x4xf32>, vector<4x4xf32> -> vector<4x4xf32>
    %cst_3 = arith.constant 3.125000e-02 : f32
    %4 = vector.broadcast %cst_3 : f32 to vector<4x4xf32>
    %5 = arith.mulf %3, %4 : vector<4x4xf32>
    %cst_4 = arith.constant 9.99999997E-7 : f32
    %6 = vector.broadcast %cst_4 : f32 to vector<4x4xf32>
    %7 = arith.addf %5, %6 : vector<4x4xf32>
    %8 = math.rsqrt %7 : vector<4x4xf32>
    %c0_5 = arith.constant 0 : index
    %c0_6 = arith.constant 0 : index
    %9 = vector.load %arg4[%c0_5, %c0_6] : memref<4x128xf32, #tpu.memory_space<vmem>>, vector<4x128xf32>
    %cst_7 = arith.constant dense<0.000000e+00> : vector<4x128xf32>
    %10 = tpu.matmul %8, %9, %cst_7 {dimension_numbers = #tpu.dot_dimension_numbers<[1], [0], [0], [1], [0, 0, 1, 1], [], []>, precision = #tpu.contract_precision<fp32>} : vector<4x4xf32>, vector<4x128xf32>, vector<4x128xf32> -> vector<4x128xf32>
    %11 = arith.mulf %0, %10 : vector<4x128xf32>
    %c0_8 = arith.constant 0 : index
    %c0_9 = arith.constant 0 : index
    %12 = vector.load %arg2[%c0_8, %c0_9] : memref<1x128xf32, #tpu.memory_space<vmem>>, vector<1x128xf32>
    %13 = vector.broadcast %12 : vector<1x128xf32> to vector<4x128xf32>
    %14 = arith.mulf %11, %13 : vector<4x128xf32>
    %c0_10 = arith.constant 0 : index
    %c0_11 = arith.constant 0 : index
    %15 = vector.load %arg5[%c0_10, %c0_11] : memref<4x128xf32, #tpu.memory_space<vmem>>, vector<4x128xf32>
    tpu.vector_store %arg5[%c0_10, %c0_11], %14 {strides = array<i32>} : memref<4x128xf32, #tpu.memory_space<vmem>>, vector<4x128xf32>,
    return
  }
  func.func @transform_0(%arg0: i32) -> (i32, i32) {
    %c0_i32 = arith.constant 0 : i32
    %c0_i32_0 = arith.constant 0 : i32
    return %arg0, %c0_i32 : i32, i32
  }
  func.func @transform_1(%arg0: i32) -> (i32, i32) {
    %c0_i32 = arith.constant 0 : i32
    %c0_i32_0 = arith.constant 0 : i32
    %c0_i32_1 = arith.constant 0 : i32
    return %c0_i32, %c0_i32_0 : i32, i32
  }
  func.func @transform_2(%arg0: i32) -> (i32, i32) {
    %c0_i32 = arith.constant 0 : i32
    %c0_i32_0 = arith.constant 0 : i32
    %c0_i32_1 = arith.constant 0 : i32
    return %c0_i32, %c0_i32_0 : i32, i32
  }
  func.func @transform_3(%arg0: i32) -> (i32, i32) {
    %c0_i32 = arith.constant 0 : i32
    %c0_i32_0 = arith.constant 0 : i32
    %c0_i32_1 = arith.constant 0 : i32
    return %c0_i32, %c0_i32_0 : i32, i32
  }
  func.func @transform_4(%arg0: i32) -> (i32, i32) {
    %c0_i32 = arith.constant 0 : i32
    %c0_i32_0 = arith.constant 0 : i32
    return %arg0, %c0_i32 : i32, i32
  }
}

</mosaic_0001>

<llo_original>
// kernel: tpu_custom_call.1
$region0: #{tpu_custom_call.1}
  #allocation0 [shape = 'u32[]', space=smem, size = 0x4, offset = 0x4, fixed_abs, tag = 'smem constant byte address 0x4 - core index']
  #allocation1 [shape = 'u32[144,128]{1,0:T(1,128)}', space=vmem, size = 0x12000, scoped, tag = 'internal scratch']
  %s0 = inlined_call_operand.vmem [shape: f32[4,128], index: 0, kind: input, shape index: {}]
  %s1 = inlined_call_operand.vmem [shape: f32[1,128], index: 1, kind: input, shape index: {}]
  %s2 = inlined_call_operand.vmem [shape: f32[128,4], index: 2, kind: input, shape index: {}]
  %s3 = inlined_call_operand.vmem [shape: f32[4,128], index: 3, kind: input, shape index: {}]
  %s4 = inlined_call_operand.hbm [shape: f32[4,128], index: 4, kind: output, shape index: {}]
  %s5 = sld [smem:[#allocation0]]
  $region26: #{tpu_custom_call.1} parent=0
    _
  %s7 = ssub.s32 1, %s5
  %s8 = scalar_select 0, %s7, %s5
  $region1: #{tpu_custom_call.1} parent=0
    #allocation2 [shape = 'u8[2048]{0}', space=vmem, size = 0x800, scoped, tag = 'output window, operand 0, single buffered']
    #allocation3 [shape = 's32[1]{0}', space=sflag, size = 0x4, scoped, tag = 'scoped memory for tpu_custom_call.1']
    %9 = vsyncpa [#allocation3], 0
    // Predicated region
    $region2: #{tpu_custom_call.1} parent=1 // pred_check
      _
    $region3: #{tpu_custom_call.1} parent=1 // pred_check_branch
      %11 = sbr.rel (0) target = $region5
    $region4: #{tpu_custom_call.1} parent=1 // pred_region
      _
    $region5: #{tpu_custom_call.1} parent=1 // pred_fallthru
      _
    // Predicated region
    $region6: #{tpu_custom_call.1} parent=1 // pred_check
      _
    $region7: #{tpu_custom_call.1} parent=1 // pred_check_branch
      %13 = sbr.rel (0) target = $region9
    $region8: #{tpu_custom_call.1} parent=1 // pred_region
      _
    $region9: #{tpu_custom_call.1} parent=1 // pred_fallthru
      _
    // Predicated region
    $region10: #{tpu_custom_call.1} parent=1 // pred_check
      _
    $region11: #{tpu_custom_call.1} parent=1 // pred_check_branch
      %15 = sbr.rel (0) target = $region13
    $region12: #{tpu_custom_call.1} parent=1 // pred_region
      _
    $region13: #{tpu_custom_call.1} parent=1 // pred_fallthru
      _
    // Predicated region
    $region14: #{tpu_custom_call.1} parent=1 // pred_check
      _
    $region15: #{tpu_custom_call.1} parent=1 // pred_check_branch
      %17 = sbr.rel (0) target = $region17
    $region16: #{tpu_custom_call.1} parent=1 // pred_region
      _
    $region17: #{tpu_custom_call.1} parent=1 // pred_fallthru
      _
    %v18 = vld [vmem:[%s0] sm:$0xf]
    %v19 = vmul.f32 %v18, %v18
    %v20 = vld [vmem:[%s2] sm:$0xff]
    %v21 = vld [vmem:[%s2 + $0x8] sm:$0xff]
    %v22 = vld [vmem:[%s2 + $0x10] sm:$0xff]
    %v23 = vld [vmem:[%s2 + $0x18] sm:$0xff]
    %v24 = vld [vmem:[%s2 + $0x20] sm:$0xff]
    %v25 = vld [vmem:[%s2 + $0x28] sm:$0xff]
    %v26 = vld [vmem:[%s2 + $0x30] sm:$0xff]
    %v27 = vld [vmem:[%s2 + $0x38] sm:$0xff]
    %v28 = vld [vmem:[%s2 + $0x40] sm:$0xff]
    %v29 = vld [vmem:[%s2 + $0x48] sm:$0xff]
    %v30 = vld [vmem:[%s2 + $0x50] sm:$0xff]
    %v31 = vld [vmem:[%s2 + $0x58] sm:$0xff]
    %v32 = vld [vmem:[%s2 + $0x60] sm:$0xff]
    %v33 = vld [vmem:[%s2 + $0x68] sm:$0xff]
    %v34 = vld [vmem:[%s2 + $0x70] sm:$0xff]
    %v35 = vld [vmem:[%s2 + $0x78] sm:$0xff]
    %36 = vmatprep.subr.mxu0 0.0
    %v37 = vand.u32 %v20, 4294901760
    %38 = vmatpush1.msra.mxu0 %v37
    %39 = vmatprep.subr.mxu0 0.0
    %v40 = vand.u32 %v21, 4294901760
    %41 = vmatpush1.msra.mxu0 %v40
    %42 = vmatprep.subr.mxu0 0.0
    %v43 = vand.u32 %v22, 4294901760
    %44 = vmatpush1.msra.mxu0 %v43
    %45 = vmatprep.subr.mxu0 0.0
    %v46 = vand.u32 %v23, 4294901760
    %47 = vmatpush1.msra.mxu0 %v46
    %48 = vmatprep.subr.mxu0 0.0
    %v49 = vand.u32 %v24, 4294901760
    %50 = vmatpush1.msra.mxu0 %v49
    %51 = vmatprep.subr.mxu0 0.0
    %v52 = vand.u32 %v25, 4294901760
    %53 = vmatpush1.msra.mxu0 %v52
    %54 = vmatprep.subr.mxu0 0.0
    %v55 = vand.u32 %v26, 4294901760
    %56 = vmatpush1.msra.mxu0 %v55
    %57 = vmatprep.subr.mxu0 0.0
    %v58 = vand.u32 %v27, 4294901760
    %59 = vmatpush1.msra.mxu0 %v58
    %60 = vmatprep.subr.mxu0 0.0
    %v61 = vand.u32 %v28, 4294901760
    %62 = vmatpush1.msra.mxu0 %v61
    %63 = vmatprep.subr.mxu0 0.0
    %v64 = vand.u32 %v29, 4294901760
    %65 = vmatpush1.msra.mxu0 %v64
    %66 = vmatprep.subr.mxu0 0.0
    %v67 = vand.u32 %v30, 4294901760
    %68 = vmatpush1.msra.mxu0 %v67
    %69 = vmatprep.subr.mxu0 0.0
    %v70 = vand.u32 %v31, 4294901760
    %71 = vmatpush1.msra.mxu0 %v70
    %72 = vmatprep.subr.mxu0 0.0
    %v73 = vand.u32 %v32, 4294901760
    %74 = vmatpush1.msra.mxu0 %v73
    %75 = vmatprep.subr.mxu0 0.0
    %v76 = vand.u32 %v33, 4294901760
    %77 = vmatpush1.msra.mxu0 %v76
    %78 = vmatprep.subr.mxu0 0.0
    %v79 = vand.u32 %v34, 4294901760
    %80 = vmatpush1.msra.mxu0 %v79
    %81 = vmatprep.subr.mxu0 0.0
    %v82 = vand.u32 %v35, 4294901760
    %83 = vmatpush1.msra.mxu0 %v82
    %84 = vmatprep.subr.mxu0 0.0
    %85 = vmatpush1.msra.mxu0 0.0
    %86 = vmatprep.subr.mxu0 0.0
    %87 = vmatpush1.msra.mxu0 0.0
    %88 = vmatprep.subr.mxu0 0.0
    %89 = vmatpush1.msra.mxu0 0.0
    %90 = vmatprep.subr.mxu0 0.0
    %91 = vmatpush1.msra.mxu0 0.0
    %92 = vmatprep.subr.mxu0 0.0
    %93 = vmatpush1.msra.mxu0 0.0
    %94 = vmatprep.subr.mxu0 0.0
    %95 = vmatpush1.msra.mxu0 0.0
    %96 = vmatprep.subr.mxu0 0.0
    %97 = vmatpush1.msra.mxu0 0.0
    %98 = vmatprep.subr.mxu0 0.0
    %99 = vmatpush1.msra.mxu0 0.0
    %100 = vmatprep.subr.mxu0 0.0
    %101 = vmatpush1.msra.mxu0 0.0
    %102 = vmatprep.subr.mxu0 0.0
    %103 = vmatpush1.msra.mxu0 0.0
    %104 = vmatprep.subr.mxu0 0.0
    %105 = vmatpush1.msra.mxu0 0.0
    %106 = vmatprep.subr.mxu0 0.0
    %107 = vmatpush1.msra.mxu0 0.0
    %108 = vmatprep.subr.mxu0 0.0
    %109 = vmatpush1.msra.mxu0 0.0
    %110 = vmatprep.subr.mxu0 0.0
    %111 = vmatpush1.msra.mxu0 0.0
    %112 = vmatprep.subr.mxu0 0.0
    %113 = vmatpush1.msra.mxu0 0.0
    %114 = vmatprep.subr.mxu0 0.0
    %115 = vmatpush1.msra.mxu0 0.0
    %116 = vmatprep.mubr.f32.mxu0 0.0
    %v117 = vand.u32 %v19, 4294901760
    %v118 = vsub.f32 %v19, %v117
    %v119 = vand.u32 %v118, 4294901760
    %v120 = vsub.f32 %v118, %v119
    %v121 = vand.u32 %v120, 4294901760
    %122 = vmatmul.mubr.f32.gmra.mrb[0].mxu0 %v121
    %v123 = vpop.f32.mrb[0].mxu0
    %v124 = vadd.f32 0.0, %v123
    %v125 = vpop.f32.mrb[0].mxu0
    %126 = vdwg.mxu0
    %127 = vmatprep.subr.mxu0 0.0
    %v128 = vand.u32 %v20, 4294901760
    %v129 = vsub.f32 %v20, %v128
    %v130 = vand.u32 %v129, 4294901760
    %v131 = vsub.f32 %v129, %v130
    %v132 = vand.u32 %v131, 4294901760
    %133 = vmatpush1.msra.mxu0 %v132
    %134 = vmatprep.subr.mxu0 0.0
    %v135 = vand.u32 %v21, 4294901760
    %v136 = vsub.f32 %v21, %v135
    %v137 = vand.u32 %v136, 4294901760
    %v138 = vsub.f32 %v136, %v137
    %v139 = vand.u32 %v138, 4294901760
    %140 = vmatpush1.msra.mxu0 %v139
    %141 = vmatprep.subr.mxu0 0.0
    %v142 = vand.u32 %v22, 4294901760
    %v143 = vsub.f32 %v22, %v142
    %v144 = vand.u32 %v143, 4294901760
    %v145 = vsub.f32 %v143, %v144
    %v146 = vand.u32 %v145, 4294901760
    %147 = vmatpush1.msra.mxu0 %v146
    %148 = vmatprep.subr.mxu0 0.0
    %v149 = vand.u32 %v23, 4294901760
    %v150 = vsub.f32 %v23, %v149
    %v151 = vand.u32 %v150, 4294901760
    %v152 = vsub.f32 %v150, %v151
    %v153 = vand.u32 %v152, 4294901760
    %154 = vmatpush1.msra.mxu0 %v153
    %155 = vmatprep.subr.mxu0 0.0
    %v156 = vand.u32 %v24, 4294901760
    %v157 = vsub.f32 %v24, %v156
    %v158 = vand.u32 %v157, 4294901760
    %v159 = vsub.f32 %v157, %v158
    %v160 = vand.u32 %v159, 4294901760
    %161 = vmatpush1.msra.mxu0 %v160
    %162 = vmatprep.subr.mxu0 0.0
    %v163 = vand.u32 %v25, 4294901760
    %v164 = vsub.f32 %v25, %v163
    %v165 = vand.u32 %v164, 4294901760
    %v166 = vsub.f32 %v164, %v165
    %v167 = vand.u32 %v166, 4294901760
    %168 = vmatpush1.msra.mxu0 %v167
    %169 = vmatprep.subr.mxu0 0.0
    %v170 = vand.u32 %v26, 4294901760
    %v171 = vsub.f32 %v26, %v170
    %v172 = vand.u32 %v171, 4294901760
    %v173 = vsub.f32 %v171, %v172
    %v174 = vand.u32 %v173, 4294901760
    %175 = vmatpush1.msra.mxu0 %v174
    %176 = vmatprep.subr.mxu0 0.0
    %v177 = vand.u32 %v27, 4294901760
    %v178 = vsub.f32 %v27, %v177
    %v179 = vand.u32 %v178, 4294901760
    %v180 = vsub.f32 %v178, %v179
    %v181 = vand.u32 %v180, 4294901760
    %182 = vmatpush1.msra.mxu0 %v181
    %183 = vmatprep.subr.mxu0 0.0
    %v184 = vand.u32 %v28, 4294901760
    %v185 = vsub.f32 %v28, %v184
    %v186 = vand.u32 %v185, 4294901760
    %v187 = vsub.f32 %v185, %v186
    %v188 = vand.u32 %v187, 4294901760
    %189 = vmatpush1.msra.mxu0 %v188
    %190 = vmatprep.subr.mxu0 0.0
    %v191 = vand.u32 %v29, 4294901760
    %v192 = vsub.f32 %v29, %v191
    %v193 = vand.u32 %v192, 4294901760
    %v194 = vsub.f32 %v192, %v193
    %v195 = vand.u32 %v194, 4294901760
    %196 = vmatpush1.msra.mxu0 %v195
    %197 = vmatprep.subr.mxu0 0.0
    %v198 = vand.u32 %v30, 4294901760
    %v199 = vsub.f32 %v30, %v198
    %v200 = vand.u32 %v199, 4294901760
    %v201 = vsub.f32 %v199, %v200
    %v202 = vand.u32 %v201, 4294901760
    %203 = vmatpush1.msra.mxu0 %v202
    %204 = vmatprep.subr.mxu0 0.0
    %v205 = vand.u32 %v31, 4294901760
    %v206 = vsub.f32 %v31, %v205
    %v207 = vand.u32 %v206, 4294901760
    %v208 = vsub.f32 %v206, %v207
    %v209 = vand.u32 %v208, 4294901760
    %210 = vmatpush1.msra.mxu0 %v209
    %211 = vmatprep.subr.mxu0 0.0
    %v212 = vand.u32 %v32, 4294901760
    %v213 = vsub.f32 %v32, %v212
    %v214 = vand.u32 %v213, 4294901760
    %v215 = vsub.f32 %v213, %v214
    %v216 = vand.u32 %v215, 4294901760
    %217 = vmatpush1.msra.mxu0 %v216
    %218 = vmatprep.subr.mxu0 0.0
    %v219 = vand.u32 %v33, 4294901760
    %v220 = vsub.f32 %v33, %v219
    %v221 = vand.u32 %v220, 4294901760
    %v222 = vsub.f32 %v220, %v221
    %v223 = vand.u32 %v222, 4294901760
    %224 = vmatpush1.msra.mxu0 %v223
    %225 = vmatprep.subr.mxu0 0.0
    %v226 = vand.u32 %v34, 4294901760
    %v227 = vsub.f32 %v34, %v226
    %v228 = vand.u32 %v227, 4294901760
    %v229 = vsub.f32 %v227, %v228
    %v230 = vand.u32 %v229, 4294901760
    %231 = vmatpush1.msra.mxu0 %v230
    %232 = vmatprep.subr.mxu0 0.0
    %v233 = vand.u32 %v35, 4294901760
    %v234 = vsub.f32 %v35, %v233
    %v235 = vand.u32 %v234, 4294901760
    %v236 = vsub.f32 %v234, %v235
    %v237 = vand.u32 %v236, 4294901760
    %238 = vmatpush1.msra.mxu0 %v237
    %239 = vmatprep.subr.mxu0 0.0
    %240 = vmatpush1.msra.mxu0 0.0
    %241 = vmatprep.subr.mxu0 0.0
    %242 = vmatpush1.msra.mxu0 0.0
    %243 = vmatprep.subr.mxu0 0.0
    %244 = vmatpush1.msra.mxu0 0.0
    %245 = vmatprep.subr.mxu0 0.0
    %246 = vmatpush1.msra.mxu0 0.0
    %247 = vmatprep.subr.mxu0 0.0
    %248 = vmatpush1.msra.mxu0 0.0
    %249 = vmatprep.subr.mxu0 0.0
    %250 = vmatpush1.msra.mxu0 0.0
    %251 = vmatprep.subr.mxu0 0.0
    %252 = vmatpush1.msra.mxu0 0.0
    %253 = vmatprep.subr.mxu0 0.0
    %254 = vmatpush1.msra.mxu0 0.0
    %255 = vmatprep.subr.mxu0 0.0
    %256 = vmatpush1.msra.mxu0 0.0
    %257 = vmatprep.subr.mxu0 0.0
    %258 = vmatpush1.msra.mxu0 0.0
    %259 = vmatprep.subr.mxu0 0.0
    %260 = vmatpush1.msra.mxu0 0.0
    %261 = vmatprep.subr.mxu0 0.0
    %262 = vmatpush1.msra.mxu0 0.0
    %263 = vmatprep.subr.mxu0 0.0
    %264 = vmatpush1.msra.mxu0 0.0
    %265 = vmatprep.subr.mxu0 0.0
    %266 = vmatpush1.msra.mxu0 0.0
    %267 = vmatprep.subr.mxu0 0.0
    %268 = vmatpush1.msra.mxu0 0.0
    %269 = vmatprep.subr.mxu0 0.0
    %270 = vmatpush1.msra.mxu0 0.0
    %271 = vmatprep.mubr.f32.mxu0 0.0
    %v272 = vand.u32 %v19, 4294901760
    %273 = vmatmul.mubr.f32.gmra.mrb[0].mxu0 %v272
    %v274 = vpop.f32.mrb[0].mxu0
    %v275 = vadd.f32 %v124, %v274
    %v276 = vpop.f32.mrb[0].mxu0
    %277 = vdwg.mxu0
    %278 = vmatprep.subr.mxu0 0.0
    %v279 = vand.u32 %v20, 4294901760
    %v280 = vsub.f32 %v20, %v279
    %281 = vmatpush1.msra.mxu0 %v280
    %282 = vmatprep.subr.mxu0 0.0
    %v283 = vand.u32 %v21, 4294901760
    %v284 = vsub.f32 %v21, %v283
    %285 = vmatpush1.msra.mxu0 %v284
    %286 = vmatprep.subr.mxu0 0.0
    %v287 = vand.u32 %v22, 4294901760
    %v288 = vsub.f32 %v22, %v287
    %289 = vmatpush1.msra.mxu0 %v288
    %290 = vmatprep.subr.mxu0 0.0
    %v291 = vand.u32 %v23, 4294901760
    %v292 = vsub.f32 %v23, %v291
    %293 = vmatpush1.msra.mxu0 %v292
    %294 = vmatprep.subr.mxu0 0.0
    %v295 = vand.u32 %v24, 4294901760
    %v296 = vsub.f32 %v24, %v295
    %297 = vmatpush1.msra.mxu0 %v296
    %298 = vmatprep.subr.mxu0 0.0
    %v299 = vand.u32 %v25, 4294901760
    %v300 = vsub.f32 %v25, %v299
    %301 = vmatpush1.msra.mxu0 %v300
    %302 = vmatprep.subr.mxu0 0.0
    %v303 = vand.u32 %v26, 4294901760
    %v304 = vsub.f32 %v26, %v303
    %305 = vmatpush1.msra.mxu0 %v304
    %306 = vmatprep.subr.mxu0 0.0
    %v307 = vand.u32 %v27, 4294901760
    %v308 = vsub.f32 %v27, %v307
    %309 = vmatpush1.msra.mxu0 %v308
    %310 = vmatprep.subr.mxu0 0.0
    %v311 = vand.u32 %v28, 4294901760
    %v312 = vsub.f32 %v28, %v311
    %313 = vmatpush1.msra.mxu0 %v312
    %314 = vmatprep.subr.mxu0 0.0
    %v315 = vand.u32 %v29, 4294901760
    %v316 = vsub.f32 %v29, %v315
    %317 = vmatpush1.msra.mxu0 %v316
    %318 = vmatprep.subr.mxu0 0.0
    %v319 = vand.u32 %v30, 4294901760
    %v320 = vsub.f32 %v30, %v319
    %321 = vmatpush1.msra.mxu0 %v320
    %322 = vmatprep.subr.mxu0 0.0
    %v323 = vand.u32 %v31, 4294901760
    %v324 = vsub.f32 %v31, %v323
    %325 = vmatpush1.msra.mxu0 %v324
    %326 = vmatprep.subr.mxu0 0.0
    %v327 = vand.u32 %v32, 4294901760
    %v328 = vsub.f32 %v32, %v327
    %329 = vmatpush1.msra.mxu0 %v328
    %330 = vmatprep.subr.mxu0 0.0
    %v331 = vand.u32 %v33, 4294901760
    %v332 = vsub.f32 %v33, %v331
    %333 = vmatpush1.msra.mxu0 %v332
    %334 = vmatprep.subr.mxu0 0.0
    %v335 = vand.u32 %v34, 4294901760
    %v336 = vsub.f32 %v34, %v335
    %337 = vmatpush1.msra.mxu0 %v336
    %338 = vmatprep.subr.mxu0 0.0
    %v339 = vand.u32 %v35, 4294901760
    %v340 = vsub.f32 %v35, %v339
    %341 = vmatpush1.msra.mxu0 %v340
    %342 = vmatprep.subr.mxu0 0.0
    %343 = vmatpush1.msra.mxu0 0.0
    %344 = vmatprep.subr.mxu0 0.0
    %345 = vmatpush1.msra.mxu0 0.0
    %346 = vmatprep.subr.mxu0 0.0
    %347 = vmatpush1.msra.mxu0 0.0
    %348 = vmatprep.subr.mxu0 0.0
    %349 = vmatpush1.msra.mxu0 0.0
    %350 = vmatprep.subr.mxu0 0.0
    %351 = vmatpush1.msra.mxu0 0.0
    %352 = vmatprep.subr.mxu0 0.0
    %353 = vmatpush1.msra.mxu0 0.0
    %354 = vmatprep.subr.mxu0 0.0
    %355 = vmatpush1.msra.mxu0 0.0
    %356 = vmatprep.subr.mxu0 0.0
    %357 = vmatpush1.msra.mxu0 0.0
    %358 = vmatprep.subr.mxu0 0.0
    %359 = vmatpush1.msra.mxu0 0.0
    %360 = vmatprep.subr.mxu0 0.0
    %361 = vmatpush1.msra.mxu0 0.0
    %362 = vmatprep.subr.mxu0 0.0
    %363 = vmatpush1.msra.mxu0 0.0
    %364 = vmatprep.subr.mxu0 0.0
    %365 = vmatpush1.msra.mxu0 0.0
    %366 = vmatprep.subr.mxu0 0.0
    %367 = vmatpush1.msra.mxu0 0.0
    %368 = vmatprep.subr.mxu0 0.0
    %369 = vmatpush1.msra.mxu0 0.0
    %370 = vmatprep.subr.mxu0 0.0
    %371 = vmatpush1.msra.mxu0 0.0
    %372 = vmatprep.subr.mxu0 0.0
    %373 = vmatpush1.msra.mxu0 0.0
    %374 = vmatprep.mubr.f32.mxu0 0.0
    %v375 = vand.u32 %v19, 4294901760
    %v376 = vsub.f32 %v19, %v375
    %377 = vmatmul.mubr.f32.gmra.mrb[0].mxu0 %v376
    %v378 = vpop.f32.mrb[0].mxu0
    %v379 = vadd.f32 %v275, %v378
    %v380 = vpop.f32.mrb[0].mxu0
    %381 = vdwg.mxu0
    %382 = vmatprep.subr.mxu0 0.0
    %v383 = vand.u32 %v20, 4294901760
    %384 = vmatpush1.msra.mxu0 %v383
    %385 = vmatprep.subr.mxu0 0.0
    %v386 = vand.u32 %v21, 4294901760
    %387 = vmatpush1.msra.mxu0 %v386
    %388 = vmatprep.subr.mxu0 0.0
    %v389 = vand.u32 %v22, 4294901760
    %390 = vmatpush1.msra.mxu0 %v389
    %391 = vmatprep.subr.mxu0 0.0
    %v392 = vand.u32 %v23, 4294901760
    %393 = vmatpush1.msra.mxu0 %v392
    %394 = vmatprep.subr.mxu0 0.0
    %v395 = vand.u32 %v24, 4294901760
    %396 = vmatpush1.msra.mxu0 %v395
    %397 = vmatprep.subr.mxu0 0.0
    %v398 = vand.u32 %v25, 4294901760
    %399 = vmatpush1.msra.mxu0 %v398
    %400 = vmatprep.subr.mxu0 0.0
    %v401 = vand.u32 %v26, 4294901760
    %402 = vmatpush1.msra.mxu0 %v401
    %403 = vmatprep.subr.mxu0 0.0
    %v404 = vand.u32 %v27, 4294901760
    %405 = vmatpush1.msra.mxu0 %v404
    %406 = vmatprep.subr.mxu0 0.0
    %v407 = vand.u32 %v28, 4294901760
    %408 = vmatpush1.msra.mxu0 %v407
    %409 = vmatprep.subr.mxu0 0.0
    %v410 = vand.u32 %v29, 4294901760
    %411 = vmatpush1.msra.mxu0 %v410
    %412 = vmatprep.subr.mxu0 0.0
    %v413 = vand.u32 %v30, 4294901760
    %414 = vmatpush1.msra.mxu0 %v413
    %415 = vmatprep.subr.mxu0 0.0
    %v416 = vand.u32 %v31, 4294901760
    %417 = vmatpush1.msra.mxu0 %v416
    %418 = vmatprep.subr.mxu0 0.0
    %v419 = vand.u32 %v32, 4294901760
    %420 = vmatpush1.msra.mxu0 %v419
    %421 = vmatprep.subr.mxu0 0.0
    %v422 = vand.u32 %v33, 4294901760
    %423 = vmatpush1.msra.mxu0 %v422
    %424 = vmatprep.subr.mxu0 0.0
    %v425 = vand.u32 %v34, 4294901760
    %426 = vmatpush1.msra.mxu0 %v425
    %427 = vmatprep.subr.mxu0 0.0
    %v428 = vand.u32 %v35, 4294901760
    %429 = vmatpush1.msra.mxu0 %v428
    %430 = vmatprep.subr.mxu0 0.0
    %431 = vmatpush1.msra.mxu0 0.0
    %432 = vmatprep.subr.mxu0 0.0
    %433 = vmatpush1.msra.mxu0 0.0
    %434 = vmatprep.subr.mxu0 0.0
    %435 = vmatpush1.msra.mxu0 0.0
    %436 = vmatprep.subr.mxu0 0.0
    %437 = vmatpush1.msra.mxu0 0.0
    %438 = vmatprep.subr.mxu0 0.0
    %439 = vmatpush1.msra.mxu0 0.0
    %440 = vmatprep.subr.mxu0 0.0
    %441 = vmatpush1.msra.mxu0 0.0
    %442 = vmatprep.subr.mxu0 0.0
    %443 = vmatpush1.msra.mxu0 0.0
    %444 = vmatprep.subr.mxu0 0.0
    %445 = vmatpush1.msra.mxu0 0.0
    %446 = vmatprep.subr.mxu0 0.0
    %447 = vmatpush1.msra.mxu0 0.0
    %448 = vmatprep.subr.mxu0 0.0
    %449 = vmatpush1.msra.mxu0 0.0
    %450 = vmatprep.subr.mxu0 0.0
    %451 = vmatpush1.msra.mxu0 0.0
    %452 = vmatprep.subr.mxu0 0.0
    %453 = vmatpush1.msra.mxu0 0.0
    %454 = vmatprep.subr.mxu0 0.0
    %455 = vmatpush1.msra.mxu0 0.0
    %456 = vmatprep.subr.mxu0 0.0
    %457 = vmatpush1.msra.mxu0 0.0
    %458 = vmatprep.subr.mxu0 0.0
    %459 = vmatpush1.msra.mxu0 0.0
    %460 = vmatprep.subr.mxu0 0.0
    %461 = vmatpush1.msra.mxu0 0.0
    %462 = vmatprep.mubr.f32.mxu0 0.0
    %v463 = vand.u32 %v19, 4294901760
    %v464 = vsub.f32 %v19, %v463
    %v465 = vand.u32 %v464, 4294901760
    %466 = vmatmul.mubr.f32.gmra.mrb[0].mxu0 %v465
    %v467 = vpop.f32.mrb[0].mxu0
    %v468 = vadd.f32 %v379, %v467
    %v469 = vpop.f32.mrb[0].mxu0
    %470 = vdwg.mxu0
    %471 = vmatprep.subr.mxu0 0.0
    %v472 = vand.u32 %v20, 4294901760
    %v473 = vsub.f32 %v20, %v472
    %v474 = vand.u32 %v473, 4294901760
    %475 = vmatpush1.msra.mxu0 %v474
    %476 = vmatprep.subr.mxu0 0.0
    %v477 = vand.u32 %v21, 4294901760
    %v478 = vsub.f32 %v21, %v477
    %v479 = vand.u32 %v478, 4294901760
    %480 = vmatpush1.msra.mxu0 %v479
    %481 = vmatprep.subr.mxu0 0.0
    %v482 = vand.u32 %v22, 4294901760
    %v483 = vsub.f32 %v22, %v482
    %v484 = vand.u32 %v483, 4294901760
    %485 = vmatpush1.msra.mxu0 %v484
    %486 = vmatprep.subr.mxu0 0.0
    %v487 = vand.u32 %v23, 4294901760
    %v488 = vsub.f32 %v23, %v487
    %v489 = vand.u32 %v488, 4294901760
    %490 = vmatpush1.msra.mxu0 %v489
    %491 = vmatprep.subr.mxu0 0.0
    %v492 = vand.u32 %v24, 4294901760
    %v493 = vsub.f32 %v24, %v492
    %v494 = vand.u32 %v493, 4294901760
    %495 = vmatpush1.msra.mxu0 %v494
    %496 = vmatprep.subr.mxu0 0.0
    %v497 = vand.u32 %v25, 4294901760
    %v498 = vsub.f32 %v25, %v497
    %v499 = vand.u32 %v498, 4294901760
    %500 = vmatpush1.msra.mxu0 %v499
    %501 = vmatprep.subr.mxu0 0.0
    %v502 = vand.u32 %v26, 4294901760
    %v503 = vsub.f32 %v26, %v502
    %v504 = vand.u32 %v503, 4294901760
    %505 = vmatpush1.msra.mxu0 %v504
    %506 = vmatprep.subr.mxu0 0.0
    %v507 = vand.u32 %v27, 4294901760
    %v508 = vsub.f32 %v27, %v507
    %v509 = vand.u32 %v508, 4294901760
    %510 = vmatpush1.msra.mxu0 %v509
    %511 = vmatprep.subr.mxu0 0.0
    %v512 = vand.u32 %v28, 4294901760
    %v513 = vsub.f32 %v28, %v512
    %v514 = vand.u32 %v513, 4294901760
    %515 = vmatpush1.msra.mxu0 %v514
    %516 = vmatprep.subr.mxu0 0.0
    %v517 = vand.u32 %v29, 4294901760
    %v518 = vsub.f32 %v29, %v517
    %v519 = vand.u32 %v518, 4294901760
    %520 = vmatpush1.msra.mxu0 %v519
    %521 = vmatprep.subr.mxu0 0.0
    %v522 = vand.u32 %v30, 4294901760
    %v523 = vsub.f32 %v30, %v522
    %v524 = vand.u32 %v523, 4294901760
    %525 = vmatpush1.msra.mxu0 %v524
    %526 = vmatprep.subr.mxu0 0.0
    %v527 = vand.u32 %v31, 4294901760
    %v528 = vsub.f32 %v31, %v527
    %v529 = vand.u32 %v528, 4294901760
    %530 = vmatpush1.msra.mxu0 %v529
    %531 = vmatprep.subr.mxu0 0.0
    %v532 = vand.u32 %v32, 4294901760
    %v533 = vsub.f32 %v32, %v532
    %v534 = vand.u32 %v533, 4294901760
    %535 = vmatpush1.msra.mxu0 %v534
    %536 = vmatprep.subr.mxu0 0.0
    %v537 = vand.u32 %v33, 4294901760
    %v538 = vsub.f32 %v33, %v537
    %v539 = vand.u32 %v538, 4294901760
    %540 = vmatpush1.msra.mxu0 %v539
    %541 = vmatprep.subr.mxu0 0.0
    %v542 = vand.u32 %v34, 4294901760
    %v543 = vsub.f32 %v34, %v542
    %v544 = vand.u32 %v543, 4294901760
    %545 = vmatpush1.msra.mxu0 %v544
    %546 = vmatprep.subr.mxu0 0.0
    %v547 = vand.u32 %v35, 4294901760
    %v548 = vsub.f32 %v35, %v547
    %v549 = vand.u32 %v548, 4294901760
    %550 = vmatpush1.msra.mxu0 %v549
    %551 = vmatprep.subr.mxu0 0.0
    %552 = vmatpush1.msra.mxu0 0.0
    %553 = vmatprep.subr.mxu0 0.0
    %554 = vmatpush1.msra.mxu0 0.0
    %555 = vmatprep.subr.mxu0 0.0
    %556 = vmatpush1.msra.mxu0 0.0
    %557 = vmatprep.subr.mxu0 0.0
    %558 = vmatpush1.msra.mxu0 0.0
    %559 = vmatprep.subr.mxu0 0.0
    %560 = vmatpush1.msra.mxu0 0.0
    %561 = vmatprep.subr.mxu0 0.0
    %562 = vmatpush1.msra.mxu0 0.0
    %563 = vmatprep.subr.mxu0 0.0
    %564 = vmatpush1.msra.mxu0 0.0
    %565 = vmatprep.subr.mxu0 0.0
    %566 = vmatpush1.msra.mxu0 0.0
    %567 = vmatprep.subr.mxu0 0.0
    %568 = vmatpush1.msra.mxu0 0.0
    %569 = vmatprep.subr.mxu0 0.0
    %570 = vmatpush1.msra.mxu0 0.0
    %571 = vmatprep.subr.mxu0 0.0
    %572 = vmatpush1.msra.mxu0 0.0
    %573 = vmatprep.subr.mxu0 0.0
    %574 = vmatpush1.msra.mxu0 0.0
    %575 = vmatprep.subr.mxu0 0.0
    %576 = vmatpush1.msra.mxu0 0.0
    %577 = vmatprep.subr.mxu0 0.0
    %578 = vmatpush1.msra.mxu0 0.0
    %579 = vmatprep.subr.mxu0 0.0
    %580 = vmatpush1.msra.mxu0 0.0
    %581 = vmatprep.subr.mxu0 0.0
    %582 = vmatpush1.msra.mxu0 0.0
    %583 = vmatprep.mubr.f32.mxu0 0.0
    %v584 = vand.u32 %v19, 4294901760
    %585 = vmatmul.mubr.f32.gmra.mrb[0].mxu0 %v584
    %v586 = vpop.f32.mrb[0].mxu0
    %v587 = vadd.f32 %v468, %v586
    %v588 = vpop.f32.mrb[0].mxu0
    %589 = vdwg.mxu0
    %590 = vmatprep.subr.mxu0 0.0
    %v591 = vand.u32 %v20, 4294901760
    %592 = vmatpush1.msra.mxu0 %v591
    %593 = vmatprep.subr.mxu0 0.0
    %v594 = vand.u32 %v21, 4294901760
    %595 = vmatpush1.msra.mxu0 %v594
    %596 = vmatprep.subr.mxu0 0.0
    %v597 = vand.u32 %v22, 4294901760
    %598 = vmatpush1.msra.mxu0 %v597
    %599 = vmatprep.subr.mxu0 0.0
    %v600 = vand.u32 %v23, 4294901760
    %601 = vmatpush1.msra.mxu0 %v600
    %602 = vmatprep.subr.mxu0 0.0
    %v603 = vand.u32 %v24, 4294901760
    %604 = vmatpush1.msra.mxu0 %v603
    %605 = vmatprep.subr.mxu0 0.0
    %v606 = vand.u32 %v25, 4294901760
    %607 = vmatpush1.msra.mxu0 %v606
    %608 = vmatprep.subr.mxu0 0.0
    %v609 = vand.u32 %v26, 4294901760
    %610 = vmatpush1.msra.mxu0 %v609
    %611 = vmatprep.subr.mxu0 0.0
    %v612 = vand.u32 %v27, 4294901760
    %613 = vmatpush1.msra.mxu0 %v612
    %614 = vmatprep.subr.mxu0 0.0
    %v615 = vand.u32 %v28, 4294901760
    %616 = vmatpush1.msra.mxu0 %v615
    %617 = vmatprep.subr.mxu0 0.0
    %v618 = vand.u32 %v29, 4294901760
    %619 = vmatpush1.msra.mxu0 %v618
    %620 = vmatprep.subr.mxu0 0.0
    %v621 = vand.u32 %v30, 4294901760
    %622 = vmatpush1.msra.mxu0 %v621
    %623 = vmatprep.subr.mxu0 0.0
    %v624 = vand.u32 %v31, 4294901760
    %625 = vmatpush1.msra.mxu0 %v624
    %626 = vmatprep.subr.mxu0 0.0
    %v627 = vand.u32 %v32, 4294901760
    %628 = vmatpush1.msra.mxu0 %v627
    %629 = vmatprep.subr.mxu0 0.0
    %v630 = vand.u32 %v33, 4294901760
    %631 = vmatpush1.msra.mxu0 %v630
    %632 = vmatprep.subr.mxu0 0.0
    %v633 = vand.u32 %v34, 4294901760
    %634 = vmatpush1.msra.mxu0 %v633
    %635 = vmatprep.subr.mxu0 0.0
    %v636 = vand.u32 %v35, 4294901760
    %637 = vmatpush1.msra.mxu0 %v636
    %638 = vmatprep.subr.mxu0 0.0
    %639 = vmatpush1.msra.mxu0 0.0
    %640 = vmatprep.subr.mxu0 0.0
    %641 = vmatpush1.msra.mxu0 0.0
    %642 = vmatprep.subr.mxu0 0.0
    %643 = vmatpush1.msra.mxu0 0.0
    %644 = vmatprep.subr.mxu0 0.0
    %645 = vmatpush1.msra.mxu0 0.0
    %646 = vmatprep.subr.mxu0 0.0
    %647 = vmatpush1.msra.mxu0 0.0
    %648 = vmatprep.subr.mxu0 0.0
    %649 = vmatpush1.msra.mxu0 0.0
    %650 = vmatprep.subr.mxu0 0.0
    %651 = vmatpush1.msra.mxu0 0.0
    %652 = vmatprep.subr.mxu0 0.0
    %653 = vmatpush1.msra.mxu0 0.0
    %654 = vmatprep.subr.mxu0 0.0
    %655 = vmatpush1.msra.mxu0 0.0
    %656 = vmatprep.subr.mxu0 0.0
    %657 = vmatpush1.msra.mxu0 0.0
    %658 = vmatprep.subr.mxu0 0.0
    %659 = vmatpush1.msra.mxu0 0.0
    %660 = vmatprep.subr.mxu0 0.0
    %661 = vmatpush1.msra.mxu0 0.0
    %662 = vmatprep.subr.mxu0 0.0
    %663 = vmatpush1.msra.mxu0 0.0
    %664 = vmatprep.subr.mxu0 0.0
    %665 = vmatpush1.msra.mxu0 0.0
    %666 = vmatprep.subr.mxu0 0.0
    %667 = vmatpush1.msra.mxu0 0.0
    %668 = vmatprep.subr.mxu0 0.0
    %669 = vmatpush1.msra.mxu0 0.0
    %670 = vmatprep.mubr.f32.mxu0 0.0
    %v671 = vand.u32 %v19, 4294901760
    %672 = vmatmul.mubr.f32.gmra.mrb[0].mxu0 %v671
    %v673 = vpop.f32.mrb[0].mxu0
    %v674 = vadd.f32 %v587, %v673
    %v675 = vpop.f32.mrb[0].mxu0
    %676 = vdwg.mxu0
    %v677 = vmul.f32 %v674, 0.03125
    %v678 = vadd.f32 %v677, 1e-06
    %v679 = vrsqrt.pop %v678
    %v680 = vld [vmem:[%s3] sm:$0xf]
    %vm681 = vcmask 31744
    %v683 = vsel %vm681, %v679, 0
    %vm685 = vcmask 1043456
    %v687 = vsel %vm685, %v680, 0
    %689 = vmatprep.subr.mxu0 0.0
    %v690 = vand.u32 %v687, 4294901760
    %691 = vmatpush1.msra.mxu0 %v690
    %692 = vmatprep.subr.mxu0 0.0
    %693 = vmatpush1.msra.mxu0 0.0
    %694 = vmatprep.subr.mxu0 0.0
    %695 = vmatpush1.msra.mxu0 0.0
    %696 = vmatprep.subr.mxu0 0.0
    %697 = vmatpush1.msra.mxu0 0.0
    %698 = vmatprep.subr.mxu0 0.0
    %699 = vmatpush1.msra.mxu0 0.0
    %700 = vmatprep.subr.mxu0 0.0
    %701 = vmatpush1.msra.mxu0 0.0
    %702 = vmatprep.subr.mxu0 0.0
    %703 = vmatpush1.msra.mxu0 0.0
    %704 = vmatprep.subr.mxu0 0.0
    %705 = vmatpush1.msra.mxu0 0.0
    %706 = vmatprep.subr.mxu0 0.0
    %707 = vmatpush1.msra.mxu0 0.0
    %708 = vmatprep.subr.mxu0 0.0
    %709 = vmatpush1.msra.mxu0 0.0
    %710 = vmatprep.subr.mxu0 0.0
    %711 = vmatpush1.msra.mxu0 0.0
    %712 = vmatprep.subr.mxu0 0.0
    %713 = vmatpush1.msra.mxu0 0.0
    %714 = vmatprep.subr.mxu0 0.0
    %715 = vmatpush1.msra.mxu0 0.0
    %716 = vmatprep.subr.mxu0 0.0
    %717 = vmatpush1.msra.mxu0 0.0
    %718 = vmatprep.subr.mxu0 0.0
    %719 = vmatpush1.msra.mxu0 0.0
    %720 = vmatprep.subr.mxu0 0.0
    %721 = vmatpush1.msra.mxu0 0.0
    %722 = vmatprep.subr.mxu0 0.0
    %723 = vmatpush1.msra.mxu0 0.0
    %724 = vmatprep.subr.mxu0 0.0
    %725 = vmatpush1.msra.mxu0 0.0
    %726 = vmatprep.subr.mxu0 0.0
    %727 = vmatpush1.msra.mxu0 0.0
    %728 = vmatprep.subr.mxu0 0.0
    %729 = vmatpush1.msra.mxu0 0.0
    %730 = vmatprep.subr.mxu0 0.0
    %731 = vmatpush1.msra.mxu0 0.0
    %732 = vmatprep.subr.mxu0 0.0
    %733 = vmatpush1.msra.mxu0 0.0
    %734 = vmatprep.subr.mxu0 0.0
    %735 = vmatpush1.msra.mxu0 0.0
    %736 = vmatprep.subr.mxu0 0.0
    %737 = vmatpush1.msra.mxu0 0.0
    %738 = vmatprep.subr.mxu0 0.0
    %739 = vmatpush1.msra.mxu0 0.0
    %740 = vmatprep.subr.mxu0 0.0
    %741 = vmatpush1.msra.mxu0 0.0
    %742 = vmatprep.subr.mxu0 0.0
    %743 = vmatpush1.msra.mxu0 0.0
    %744 = vmatprep.subr.mxu0 0.0
    %745 = vmatpush1.msra.mxu0 0.0
    %746 = vmatprep.subr.mxu0 0.0
    %747 = vmatpush1.msra.mxu0 0.0
    %748 = vmatprep.subr.mxu0 0.0
    %749 = vmatpush1.msra.mxu0 0.0
    %750 = vmatprep.subr.mxu0 0.0
    %751 = vmatpush1.msra.mxu0 0.0
    %752 = vmatprep.subr.mxu0 0.0
    %753 = vmatpush1.msra.mxu0 0.0
    %754 = vmatprep.mubr.f32.mxu0 0.0
    %v755 = vand.u32 %v683, 4294901760
    %v756 = vsub.f32 %v683, %v755
    %v757 = vand.u32 %v756, 4294901760
    %v758 = vsub.f32 %v756, %v757
    %v759 = vand.u32 %v758, 4294901760
    %760 = vmatmul.mubr.f32.gmra.mrb[0].mxu0 %v759
    %v761 = vpop.f32.mrb[0].mxu0
    %v762 = vadd.f32 0.0, %v761
    %v763 = vpop.f32.mrb[0].mxu0
    %764 = vdwg.mxu0
    %765 = vmatprep.subr.mxu0 0.0
    %v766 = vand.u32 %v687, 4294901760
    %v767 = vsub.f32 %v687, %v766
    %v768 = vand.u32 %v767, 4294901760
    %v769 = vsub.f32 %v767, %v768
    %v770 = vand.u32 %v769, 4294901760
    %771 = vmatpush1.msra.mxu0 %v770
    %772 = vmatprep.subr.mxu0 0.0
    %773 = vmatpush1.msra.mxu0 0.0
    %774 = vmatprep.subr.mxu0 0.0
    %775 = vmatpush1.msra.mxu0 0.0
    %776 = vmatprep.subr.mxu0 0.0
    %777 = vmatpush1.msra.mxu0 0.0
    %778 = vmatprep.subr.mxu0 0.0
    %779 = vmatpush1.msra.mxu0 0.0
    %780 = vmatprep.subr.mxu0 0.0
    %781 = vmatpush1.msra.mxu0 0.0
    %782 = vmatprep.subr.mxu0 0.0
    %783 = vmatpush1.msra.mxu0 0.0
    %784 = vmatprep.subr.mxu0 0.0
    %785 = vmatpush1.msra.mxu0 0.0
    %786 = vmatprep.subr.mxu0 0.0
    %787 = vmatpush1.msra.mxu0 0.0
    %788 = vmatprep.subr.mxu0 0.0
    %789 = vmatpush1.msra.mxu0 0.0
    %790 = vmatprep.subr.mxu0 0.0
    %791 = vmatpush1.msra.mxu0 0.0
    %792 = vmatprep.subr.mxu0 0.0
    %793 = vmatpush1.msra.mxu0 0.0
    %794 = vmatprep.subr.mxu0 0.0
    %795 = vmatpush1.msra.mxu0 0.0
    %796 = vmatprep.subr.mxu0 0.0
    %797 = vmatpush1.msra.mxu0 0.0
    %798 = vmatprep.subr.mxu0 0.0
    %799 = vmatpush1.msra.mxu0 0.0
    %800 = vmatprep.subr.mxu0 0.0
    %801 = vmatpush1.msra.mxu0 0.0
    %802 = vmatprep.subr.mxu0 0.0
    %803 = vmatpush1.msra.mxu0 0.0
    %804 = vmatprep.subr.mxu0 0.0
    %805 = vmatpush1.msra.mxu0 0.0
    %806 = vmatprep.subr.mxu0 0.0
    %807 = vmatpush1.msra.mxu0 0.0
    %808 = vmatprep.subr.mxu0 0.0
    %809 = vmatpush1.msra.mxu0 0.0
    %810 = vmatprep.subr.mxu0 0.0
    %811 = vmatpush1.msra.mxu0 0.0
    %812 = vmatprep.subr.mxu0 0.0
    %813 = vmatpush1.msra.mxu0 0.0
    %814 = vmatprep.subr.mxu0 0.0
    %815 = vmatpush1.msra.mxu0 0.0
    %816 = vmatprep.subr.mxu0 0.0
    %817 = vmatpush1.msra.mxu0 0.0
    %818 = vmatprep.subr.mxu0 0.0
    %819 = vmatpush1.msra.mxu0 0.0
    %820 = vmatprep.subr.mxu0 0.0
    %821 = vmatpush1.msra.mxu0 0.0
    %822 = vmatprep.subr.mxu0 0.0
    %823 = vmatpush1.msra.mxu0 0.0
    %824 = vmatprep.subr.mxu0 0.0
    %825 = vmatpush1.msra.mxu0 0.0
    %826 = vmatprep.subr.mxu0 0.0
    %827 = vmatpush1.msra.mxu0 0.0
    %828 = vmatprep.subr.mxu0 0.0
    %829 = vmatpush1.msra.mxu0 0.0
    %830 = vmatprep.subr.mxu0 0.0
    %831 = vmatpush1.msra.mxu0 0.0
    %832 = vmatprep.subr.mxu0 0.0
    %833 = vmatpush1.msra.mxu0 0.0
    %834 = vmatprep.mubr.f32.mxu0 0.0
    %v835 = vand.u32 %v683, 4294901760
    %836 = vmatmul.mubr.f32.gmra.mrb[0].mxu0 %v835
    %v837 = vpop.f32.mrb[0].mxu0
    %v838 = vadd.f32 %v762, %v837
    %v839 = vpop.f32.mrb[0].mxu0
    %840 = vdwg.mxu0
    %841 = vmatprep.subr.mxu0 0.0
    %v842 = vand.u32 %v687, 4294901760
    %v843 = vsub.f32 %v687, %v842
    %844 = vmatpush1.msra.mxu0 %v843
    %845 = vmatprep.subr.mxu0 0.0
    %846 = vmatpush1.msra.mxu0 0.0
    %847 = vmatprep.subr.mxu0 0.0
    %848 = vmatpush1.msra.mxu0 0.0
    %849 = vmatprep.subr.mxu0 0.0
    %850 = vmatpush1.msra.mxu0 0.0
    %851 = vmatprep.subr.mxu0 0.0
    %852 = vmatpush1.msra.mxu0 0.0
    %853 = vmatprep.subr.mxu0 0.0
    %854 = vmatpush1.msra.mxu0 0.0
    %855 = vmatprep.subr.mxu0 0.0
    %856 = vmatpush1.msra.mxu0 0.0
    %857 = vmatprep.subr.mxu0 0.0
    %858 = vmatpush1.msra.mxu0 0.0
    %859 = vmatprep.subr.mxu0 0.0
    %860 = vmatpush1.msra.mxu0 0.0
    %861 = vmatprep.subr.mxu0 0.0
    %862 = vmatpush1.msra.mxu0 0.0
    %863 = vmatprep.subr.mxu0 0.0
    %864 = vmatpush1.msra.mxu0 0.0
    %865 = vmatprep.subr.mxu0 0.0
    %866 = vmatpush1.msra.mxu0 0.0
    %867 = vmatprep.subr.mxu0 0.0
    %868 = vmatpush1.msra.mxu0 0.0
    %869 = vmatprep.subr.mxu0 0.0
    %870 = vmatpush1.msra.mxu0 0.0
    %871 = vmatprep.subr.mxu0 0.0
    %872 = vmatpush1.msra.mxu0 0.0
    %873 = vmatprep.subr.mxu0 0.0
    %874 = vmatpush1.msra.mxu0 0.0
    %875 = vmatprep.subr.mxu0 0.0
    %876 = vmatpush1.msra.mxu0 0.0
    %877 = vmatprep.subr.mxu0 0.0
    %878 = vmatpush1.msra.mxu0 0.0
    %879 = vmatprep.subr.mxu0 0.0
    %880 = vmatpush1.msra.mxu0 0.0
    %881 = vmatprep.subr.mxu0 0.0
    %882 = vmatpush1.msra.mxu0 0.0
    %883 = vmatprep.subr.mxu0 0.0
    %884 = vmatpush1.msra.mxu0 0.0
    %885 = vmatprep.subr.mxu0 0.0
    %886 = vmatpush1.msra.mxu0 0.0
    %887 = vmatprep.subr.mxu0 0.0
    %888 = vmatpush1.msra.mxu0 0.0
    %889 = vmatprep.subr.mxu0 0.0
    %890 = vmatpush1.msra.mxu0 0.0
    %891 = vmatprep.subr.mxu0 0.0
    %892 = vmatpush1.msra.mxu0 0.0
    %893 = vmatprep.subr.mxu0 0.0
    %894 = vmatpush1.msra.mxu0 0.0
    %895 = vmatprep.subr.mxu0 0.0
    %896 = vmatpush1.msra.mxu0 0.0
    %897 = vmatprep.subr.mxu0 0.0
    %898 = vmatpush1.msra.mxu0 0.0
    %899 = vmatprep.subr.mxu0 0.0
    %900 = vmatpush1.msra.mxu0 0.0
    %901 = vmatprep.subr.mxu0 0.0
    %902 = vmatpush1.msra.mxu0 0.0
    %903 = vmatprep.subr.mxu0 0.0
    %904 = vmatpush1.msra.mxu0 0.0
    %905 = vmatprep.subr.mxu0 0.0
    %906 = vmatpush1.msra.mxu0 0.0
    %907 = vmatprep.mubr.f32.mxu0 0.0
    %v908 = vand.u32 %v683, 4294901760
    %v909 = vsub.f32 %v683, %v908
    %910 = vmatmul.mubr.f32.gmra.mrb[0].mxu0 %v909
    %v911 = vpop.f32.mrb[0].mxu0
    %v912 = vadd.f32 %v838, %v911
    %v913 = vpop.f32.mrb[0].mxu0
    %914 = vdwg.mxu0
    %915 = vmatprep.subr.mxu0 0.0
    %v916 = vand.u32 %v687, 4294901760
    %917 = vmatpush1.msra.mxu0 %v916
    %918 = vmatprep.subr.mxu0 0.0
    %919 = vmatpush1.msra.mxu0 0.0
    %920 = vmatprep.subr.mxu0 0.0
    %921 = vmatpush1.msra.mxu0 0.0
    %922 = vmatprep.subr.mxu0 0.0
    %923 = vmatpush1.msra.mxu0 0.0
    %924 = vmatprep.subr.mxu0 0.0
    %925 = vmatpush1.msra.mxu0 0.0
    %926 = vmatprep.subr.mxu0 0.0
    %927 = vmatpush1.msra.mxu0 0.0
    %928 = vmatprep.subr.mxu0 0.0
    %929 = vmatpush1.msra.mxu0 0.0
    %930 = vmatprep.subr.mxu0 0.0
    %931 = vmatpush1.msra.mxu0 0.0
    %932 = vmatprep.subr.mxu0 0.0
    %933 = vmatpush1.msra.mxu0 0.0
    %934 = vmatprep.subr.mxu0 0.0
    %935 = vmatpush1.msra.mxu0 0.0
    %936 = vmatprep.subr.mxu0 0.0
    %937 = vmatpush1.msra.mxu0 0.0
    %938 = vmatprep.subr.mxu0 0.0
    %939 = vmatpush1.msra.mxu0 0.0
    %940 = vmatprep.subr.mxu0 0.0
    %941 = vmatpush1.msra.mxu0 0.0
    %942 = vmatprep.subr.mxu0 0.0
    %943 = vmatpush1.msra.mxu0 0.0
    %944 = vmatprep.subr.mxu0 0.0
    %945 = vmatpush1.msra.mxu0 0.0
    %946 = vmatprep.subr.mxu0 0.0
    %947 = vmatpush1.msra.mxu0 0.0
    %948 = vmatprep.subr.mxu0 0.0
    %949 = vmatpush1.msra.mxu0 0.0
    %950 = vmatprep.subr.mxu0 0.0
    %951 = vmatpush1.msra.mxu0 0.0
    %952 = vmatprep.subr.mxu0 0.0
    %953 = vmatpush1.msra.mxu0 0.0
    %954 = vmatprep.subr.mxu0 0.0
    %955 = vmatpush1.msra.mxu0 0.0
    %956 = vmatprep.subr.mxu0 0.0
    %957 = vmatpush1.msra.mxu0 0.0
    %958 = vmatprep.subr.mxu0 0.0
    %959 = vmatpush1.msra.mxu0 0.0
    %960 = vmatprep.subr.mxu0 0.0
    %961 = vmatpush1.msra.mxu0 0.0
    %962 = vmatprep.subr.mxu0 0.0
    %963 = vmatpush1.msra.mxu0 0.0
    %964 = vmatprep.subr.mxu0 0.0
    %965 = vmatpush1.msra.mxu0 0.0
    %966 = vmatprep.subr.mxu0 0.0
    %967 = vmatpush1.msra.mxu0 0.0
    %968 = vmatprep.subr.mxu0 0.0
    %969 = vmatpush1.msra.mxu0 0.0
    %970 = vmatprep.subr.mxu0 0.0
    %971 = vmatpush1.msra.mxu0 0.0
    %972 = vmatprep.subr.mxu0 0.0
    %973 = vmatpush1.msra.mxu0 0.0
    %974 = vmatprep.subr.mxu0 0.0
    %975 = vmatpush1.msra.mxu0 0.0
    %976 = vmatprep.subr.mxu0 0.0
    %977 = vmatpush1.msra.mxu0 0.0
    %978 = vmatprep.subr.mxu0 0.0
    %979 = vmatpush1.msra.mxu0 0.0
    %980 = vmatprep.mubr.f32.mxu0 0.0
    %v981 = vand.u32 %v683, 4294901760
    %v982 = vsub.f32 %v683, %v981
    %v983 = vand.u32 %v982, 4294901760
    %984 = vmatmul.mubr.f32.gmra.mrb[0].mxu0 %v983
    %v985 = vpop.f32.mrb[0].mxu0
    %v986 = vadd.f32 %v912, %v985
    %v987 = vpop.f32.mrb[0].mxu0
    %988 = vdwg.mxu0
    %989 = vmatprep.subr.mxu0 0.0
    %v990 = vand.u32 %v687, 4294901760
    %v991 = vsub.f32 %v687, %v990
    %v992 = vand.u32 %v991, 4294901760
    %993 = vmatpush1.msra.mxu0 %v992
    %994 = vmatprep.subr.mxu0 0.0
    %995 = vmatpush1.msra.mxu0 0.0
    %996 = vmatprep.subr.mxu0 0.0
    %997 = vmatpush1.msra.mxu0 0.0
    %998 = vmatprep.subr.mxu0 0.0
    %999 = vmatpush1.msra.mxu0 0.0
    %1000 = vmatprep.subr.mxu0 0.0
    %1001 = vmatpush1.msra.mxu0 0.0
    %1002 = vmatprep.subr.mxu0 0.0
    %1003 = vmatpush1.msra.mxu0 0.0
    %1004 = vmatprep.subr.mxu0 0.0
    %1005 = vmatpush1.msra.mxu0 0.0
    %1006 = vmatprep.subr.mxu0 0.0
    %1007 = vmatpush1.msra.mxu0 0.0
    %1008 = vmatprep.subr.mxu0 0.0
    %1009 = vmatpush1.msra.mxu0 0.0
    %1010 = vmatprep.subr.mxu0 0.0
    %1011 = vmatpush1.msra.mxu0 0.0
    %1012 = vmatprep.subr.mxu0 0.0
    %1013 = vmatpush1.msra.mxu0 0.0
    %1014 = vmatprep.subr.mxu0 0.0
    %1015 = vmatpush1.msra.mxu0 0.0
    %1016 = vmatprep.subr.mxu0 0.0
    %1017 = vmatpush1.msra.mxu0 0.0
    %1018 = vmatprep.subr.mxu0 0.0
    %1019 = vmatpush1.msra.mxu0 0.0
    %1020 = vmatprep.subr.mxu0 0.0
    %1021 = vmatpush1.msra.mxu0 0.0
    %1022 = vmatprep.subr.mxu0 0.0
    %1023 = vmatpush1.msra.mxu0 0.0
    %1024 = vmatprep.subr.mxu0 0.0
    %1025 = vmatpush1.msra.mxu0 0.0
    %1026 = vmatprep.subr.mxu0 0.0
    %1027 = vmatpush1.msra.mxu0 0.0
    %1028 = vmatprep.subr.mxu0 0.0
    %1029 = vmatpush1.msra.mxu0 0.0
    %1030 = vmatprep.subr.mxu0 0.0
    %1031 = vmatpush1.msra.mxu0 0.0
    %1032 = vmatprep.subr.mxu0 0.0
    %1033 = vmatpush1.msra.mxu0 0.0
    %1034 = vmatprep.subr.mxu0 0.0
    %1035 = vmatpush1.msra.mxu0 0.0
    %1036 = vmatprep.subr.mxu0 0.0
    %1037 = vmatpush1.msra.mxu0 0.0
    %1038 = vmatprep.subr.mxu0 0.0
    %1039 = vmatpush1.msra.mxu0 0.0
    %1040 = vmatprep.subr.mxu0 0.0
    %1041 = vmatpush1.msra.mxu0 0.0
    %1042 = vmatprep.subr.mxu0 0.0
    %1043 = vmatpush1.msra.mxu0 0.0
    %1044 = vmatprep.subr.mxu0 0.0
    %1045 = vmatpush1.msra.mxu0 0.0
    %1046 = vmatprep.subr.mxu0 0.0
    %1047 = vmatpush1.msra.mxu0 0.0
    %1048 = vmatprep.subr.mxu0 0.0
    %1049 = vmatpush1.msra.mxu0 0.0
    %1050 = vmatprep.subr.mxu0 0.0
    %1051 = vmatpush1.msra.mxu0 0.0
    %1052 = vmatprep.subr.mxu0 0.0
    %1053 = vmatpush1.msra.mxu0 0.0
    %1054 = vmatprep.subr.mxu0 0.0
    %1055 = vmatpush1.msra.mxu0 0.0
    %1056 = vmatprep.mubr.f32.mxu0 0.0
    %v1057 = vand.u32 %v683, 4294901760
    %1058 = vmatmul.mubr.f32.gmra.mrb[0].mxu0 %v1057
    %v1059 = vpop.f32.mrb[0].mxu0
    %v1060 = vadd.f32 %v986, %v1059
    %v1061 = vpop.f32.mrb[0].mxu0
    %1062 = vdwg.mxu0
    %1063 = vmatprep.subr.mxu0 0.0
    %v1064 = vand.u32 %v687, 4294901760
    %1065 = vmatpush1.msra.mxu0 %v1064
    %1066 = vmatprep.subr.mxu0 0.0
    %1067 = vmatpush1.msra.mxu0 0.0
    %1068 = vmatprep.subr.mxu0 0.0
    %1069 = vmatpush1.msra.mxu0 0.0
    %1070 = vmatprep.subr.mxu0 0.0
    %1071 = vmatpush1.msra.mxu0 0.0
    %1072 = vmatprep.subr.mxu0 0.0
    %1073 = vmatpush1.msra.mxu0 0.0
    %1074 = vmatprep.subr.mxu0 0.0
    %1075 = vmatpush1.msra.mxu0 0.0
    %1076 = vmatprep.subr.mxu0 0.0
    %1077 = vmatpush1.msra.mxu0 0.0
    %1078 = vmatprep.subr.mxu0 0.0
    %1079 = vmatpush1.msra.mxu0 0.0
    %1080 = vmatprep.subr.mxu0 0.0
    %1081 = vmatpush1.msra.mxu0 0.0
    %1082 = vmatprep.subr.mxu0 0.0
    %1083 = vmatpush1.msra.mxu0 0.0
    %1084 = vmatprep.subr.mxu0 0.0
    %1085 = vmatpush1.msra.mxu0 0.0
    %1086 = vmatprep.subr.mxu0 0.0
    %1087 = vmatpush1.msra.mxu0 0.0
    %1088 = vmatprep.subr.mxu0 0.0
    %1089 = vmatpush1.msra.mxu0 0.0
    %1090 = vmatprep.subr.mxu0 0.0
    %1091 = vmatpush1.msra.mxu0 0.0
    %1092 = vmatprep.subr.mxu0 0.0
    %1093 = vmatpush1.msra.mxu0 0.0
    %1094 = vmatprep.subr.mxu0 0.0
    %1095 = vmatpush1.msra.mxu0 0.0
    %1096 = vmatprep.subr.mxu0 0.0
    %1097 = vmatpush1.msra.mxu0 0.0
    %1098 = vmatprep.subr.mxu0 0.0
    %1099 = vmatpush1.msra.mxu0 0.0
    %1100 = vmatprep.subr.mxu0 0.0
    %1101 = vmatpush1.msra.mxu0 0.0
    %1102 = vmatprep.subr.mxu0 0.0
    %1103 = vmatpush1.msra.mxu0 0.0
    %1104 = vmatprep.subr.mxu0 0.0
    %1105 = vmatpush1.msra.mxu0 0.0
    %1106 = vmatprep.subr.mxu0 0.0
    %1107 = vmatpush1.msra.mxu0 0.0
    %1108 = vmatprep.subr.mxu0 0.0
    %1109 = vmatpush1.msra.mxu0 0.0
    %1110 = vmatprep.subr.mxu0 0.0
    %1111 = vmatpush1.msra.mxu0 0.0
    %1112 = vmatprep.subr.mxu0 0.0
    %1113 = vmatpush1.msra.mxu0 0.0
    %1114 = vmatprep.subr.mxu0 0.0
    %1115 = vmatpush1.msra.mxu0 0.0
    %1116 = vmatprep.subr.mxu0 0.0
    %1117 = vmatpush1.msra.mxu0 0.0
    %1118 = vmatprep.subr.mxu0 0.0
    %1119 = vmatpush1.msra.mxu0 0.0
    %1120 = vmatprep.subr.mxu0 0.0
    %1121 = vmatpush1.msra.mxu0 0.0
    %1122 = vmatprep.subr.mxu0 0.0
    %1123 = vmatpush1.msra.mxu0 0.0
    %1124 = vmatprep.subr.mxu0 0.0
    %1125 = vmatpush1.msra.mxu0 0.0
    %1126 = vmatprep.subr.mxu0 0.0
    %1127 = vmatpush1.msra.mxu0 0.0
    %1128 = vmatprep.mubr.f32.mxu0 0.0
    %v1129 = vand.u32 %v683, 4294901760
    %1130 = vmatmul.mubr.f32.gmra.mrb[0].mxu0 %v1129
    %v1131 = vpop.f32.mrb[0].mxu0
    %v1132 = vadd.f32 %v1060, %v1131
    %v1133 = vpop.f32.mrb[0].mxu0
    %1134 = vdwg.mxu0
    %v1135 = vmul.f32 %v18, %v1132
    %v1136 = vld [vmem:[%s1] sm:$0x1]
    %v1138 = vlaneseq
    %v1139 = vshrl.u32 %v1138, 7
    %v1140 = vsub.s32 0, %v1139
    %v1141 = vrot.slane %v1136, %v1140
    %v1143 = vmul.f32 %v1135, %v1141
    %1144 = vst [vmem:[#allocation2] sm:$0xf] %v1143
    // Predicated region
    $region18: #{tpu_custom_call.1} parent=1 // pred_check
      _
    $region19: #{tpu_custom_call.1} parent=1 // pred_check_branch
      %1146 = sbr.rel (0) target = $region21
    $region20: #{tpu_custom_call.1} parent=1 // pred_region
      %s1148 = ssub.s32 64, 64
      %1149 = vsyncadd [#allocation3], %s1148
      %s1151 = sshll.u32 [#allocation2], 4
      %s1152 = int_to_ptr.vmem [resolvable:$true] %s1151
      %1154 = dma.vmem_to_hbm [thread:$0]  %s1152, 64, %s4, [#allocation3]
    $region21: #{tpu_custom_call.1} parent=1 // pred_fallthru
      _
    // Predicated region
    $region22: #{tpu_custom_call.1} parent=1 // pred_check
      _
    $region23: #{tpu_custom_call.1} parent=1 // pred_check_branch
      %1156 = sbr.rel (0) target = $region25
    $region24: #{tpu_custom_call.1} parent=1 // pred_region
      %1157 = dma.done [#allocation3], 64
    $region25: #{tpu_custom_call.1} parent=1 // pred_fallthru
      _
    %1158 = vsyncpa [#allocation3], 1

</llo_original>
